<compile_context>
chip_gen: v5e
topology: v5e:2x2
jax: 0.10.0
libtpu: 0.0.40
codegen_flags: <defaults>
</compile_context>

<pallas_src>
import math
import jax
import jax.numpy as jnp
from jax.experimental import pallas as pl
from jax.experimental.pallas import tpu as pltpu

_LANE = 128
_VMEM_LIMIT = 32 * 1024 * 1024   # raises v5e 16MiB default, <= v6e/v7x scoped defaults


def _round_up(x, m):
    return ((x + m - 1) // m) * m


def _divisor_tile(n_pad):
    # n_pad is a multiple of 128, so this always succeeds.
    return next(t for t in (512, 256, 128) if t <= n_pad and n_pad % t == 0)


def _pick_row_tile(n_pad, d, n_bf16_nn_streams, budget_bytes=12 * 1024 * 1024):
    """Largest row tile (multiple of 128 dividing n_pad) whose double-buffered
    per-step working set fits a conservative VMEM budget."""
    resident = 2 * n_pad * d * 2 + 2 * n_pad * 4              # bf16 Wh + el (x2 buffers)
    per_row = (n_pad * (4 * 2                                 # int32 etype tile (x2 buffers)
                        + 2 * 2 * n_bf16_nn_streams          # bf16 attn in/out streams
                        + 4 * 4)                             # f32 in-kernel temporaries
               + d * 4 * 6)                                   # er / residual / out tiles
    for tm in (512, 256, 128):
        if tm <= n_pad and n_pad % tm == 0 and resident + tm * per_row <= budget_bytes:
            return tm
    return 128


# ----------------------------------------------------------------------------
# Row-tiled linear (per-node-type input projection, with bias)
# ----------------------------------------------------------------------------
def _linear_bias_kernel(x_ref, w_ref, b_ref, o_ref):
    o_ref[...] = (jnp.dot(x_ref[...], w_ref[...],
                          preferred_element_type=jnp.float32) + b_ref[...])


def linear_pallas(x, w, b, row_tile=256):
    n, fin = x.shape
    fout = w.shape[1]
    tm = row_tile if n >= row_tile else _round_up(max(n, 8), 8)
    n_pad = _round_up(n, tm)
    xp = jnp.pad(x, ((0, n_pad - n), (0, 0)))
    out = pl.pallas_call(
        _linear_bias_kernel,
        out_shape=jax.ShapeDtypeStruct((n_pad, fout), jnp.float32),
        grid=(n_pad // tm,),
        in_specs=[pl.BlockSpec((tm, fin), lambda i: (i, 0)),
                  pl.BlockSpec((fin, fout), lambda i: (0, 0)),
                  pl.BlockSpec((1, fout), lambda i: (0, 0))],
        out_specs=pl.BlockSpec((tm, fout), lambda i: (i, 0)),
        compiler_params=pltpu.CompilerParams(
            dimension_semantics=("parallel",),
            vmem_limit_bytes=_VMEM_LIMIT),
    )(xp, w, b.reshape(1, fout))
    return out[:n]


# ----------------------------------------------------------------------------
# Head-major projection:  (N_pad, fin) @ (H, fin, fout) -> (H, N_pad, fout)
# (writes head-major directly, so no XLA reshape/transpose of Wh is needed)
# ----------------------------------------------------------------------------
def _headed_linear_kernel(x_ref, w_ref, o_ref):
    o_ref[0] = jnp.dot(x_ref[...], w_ref[0], preferred_element_type=jnp.float32)


def headed_linear_pallas(x, w_hio):
    n_pad, fin = x.shape
    nh, _, fout = w_hio.shape
    tm = _divisor_tile(n_pad)
    return pl.pallas_call(
        _headed_linear_kernel,
        out_shape=jax.ShapeDtypeStruct((nh, n_pad, fout), jnp.float32),
        grid=(nh, n_pad // tm),
        in_specs=[pl.BlockSpec((tm, fin), lambda h, i: (i, 0)),
                  pl.BlockSpec((1, fin, fout), lambda h, i: (h, 0, 0))],
        out_specs=pl.BlockSpec((1, tm, fout), lambda h, i: (h, i, 0)),
        compiler_params=pltpu.CompilerParams(
            dimension_semantics=("parallel", "parallel"),
            vmem_limit_bytes=_VMEM_LIMIT),
    )(x, w_hio)


# ----------------------------------------------------------------------------
# Edge-typed GAT convolution: row-tiled (rows outer, heads inner), fused
# edge-type bias, bf16 Wh / attention at the HBM boundary, f32 softmax math.
# ----------------------------------------------------------------------------
def _make_gat_kernel(num_etypes, negative_slope, alpha, use_res_attn,
                     use_residual, use_activation, write_attn):
    def kernel(ee_tab_ref, feat_ref, el_ref, er_ref, et_ref, *rest):
        idx = 0
        resattn_ref = resfeat_ref = attn_ref = None
        if use_res_attn:
            resattn_ref = rest[idx]; idx += 1
        if use_residual:
            resfeat_ref = rest[idx]; idx += 1
        out_ref = rest[idx]; idx += 1
        if write_attn:
            attn_ref = rest[idx]

        head = pl.program_id(1)                   # head axis is the inner grid axis
        feat = feat_ref[0]                        # (Np, D) bf16, per-head Wh
        el = el_ref[0]                            # (1, Np)  source attention term (f32)
        er = er_ref[0]                            # (TM, 1)  destination attention term (f32)
        et = et_ref[...]                          # (TM, Np) edge type, -1 = no edge
        edge = et >= 0

        # Fused per-edge edge-type bias: SMEM scalar table + a few VPU selects,
        # instead of streaming a dense (H, N, N) f32 input from HBM.
        ee = jnp.zeros(et.shape, jnp.float32)
        for t in range(num_etypes):
            ee = jnp.where(et == t, ee_tab_ref[head, t], ee)

        e = er + el + ee                                           # (TM, Np)
        e = jnp.where(e > 0, e, negative_slope * e)                # LeakyReLU
        e = jnp.where(edge, e, jnp.float32(-1e30))

        # Edge softmax over incoming edges (source axis stays un-tiled -> exact).
        m = jnp.max(e, axis=-1, keepdims=True)
        p = jnp.where(edge, jnp.exp(e - m), 0.0)
        denom = jnp.maximum(jnp.sum(p, axis=-1, keepdims=True), jnp.float32(1e-12))
        a = p / denom

        if use_res_attn:                                           # residual attention (f32 math)
            a = a * (1.0 - alpha) + resattn_ref[0].astype(jnp.float32) * alpha
        if write_attn:
            attn_ref[0] = a.astype(jnp.bfloat16)                   # bf16 at the HBM boundary

        # Aggregation: bf16 MXU inputs, f32 accumulation.
        rst = jnp.dot(a.astype(jnp.bfloat16), feat,
                      preferred_element_type=jnp.float32)          # (TM, D)
        if use_residual:
            rst = rst + resfeat_ref[0]
        if use_activation:                                         # ELU
            rst = jnp.where(rst > 0, rst, jnp.exp(jnp.minimum(rst, 0.0)) - 1.0)
        out_ref[0] = rst
    return kernel


def gat_conv_pallas(feat_hnd_bf16, el, er, et, ee_tab, res_attn, res_feat, *,
                    num_etypes, negative_slope, alpha, use_res_attn,
                    use_residual, use_activation, write_attn):
    nh, n_pad, d = feat_hnd_bf16.shape
    tm = _pick_row_tile(n_pad, d, int(use_res_attn) + int(write_attn))
    nt = n_pad // tm

    kernel = _make_gat_kernel(num_etypes, negative_slope, alpha, use_res_attn,
                              use_residual, use_activation, write_attn)

    # Grid: rows outer, heads inner -> the (tm, Np) int32 edge-type tile is fetched
    # once per row tile and reused across all heads (Pallas skips the re-DMA when the
    # block index is unchanged between consecutive steps).
    in_specs = [
        pl.BlockSpec(memory_space=pltpu.MemorySpace.SMEM),           # (H, T) ee table
        pl.BlockSpec((1, n_pad, d), lambda i, h: (h, 0, 0)),         # Wh (bf16, per head)
        pl.BlockSpec((1, 1, n_pad), lambda i, h: (h, 0, 0)),         # el (per source)
        pl.BlockSpec((1, tm, 1), lambda i, h: (h, i, 0)),            # er (per destination row)
        pl.BlockSpec((tm, n_pad), lambda i, h: (i, 0)),              # edge types (head-invariant)
    ]
    args = [ee_tab, feat_hnd_bf16, el, er, et]
    if use_res_attn:
        in_specs.append(pl.BlockSpec((1, tm, n_pad), lambda i, h: (h, i, 0)))
        args.append(res_attn)                                        # bf16
    if use_residual:
        in_specs.append(pl.BlockSpec((1, tm, d), lambda i, h: (h, i, 0)))
        args.append(res_feat)

    out_shape = [jax.ShapeDtypeStruct((nh, n_pad, d), jnp.float32)]
    out_specs = [pl.BlockSpec((1, tm, d), lambda i, h: (h, i, 0))]
    if write_attn:
        out_shape.append(jax.ShapeDtypeStruct((nh, n_pad, n_pad), jnp.bfloat16))
        out_specs.append(pl.BlockSpec((1, tm, n_pad), lambda i, h: (h, i, 0)))

    outs = pl.pallas_call(
        kernel,
        out_shape=tuple(out_shape),
        grid=(nt, nh),
        in_specs=in_specs,
        out_specs=tuple(out_specs),
        compiler_params=pltpu.CompilerParams(
            dimension_semantics=("parallel", "parallel"),
            vmem_limit_bytes=_VMEM_LIMIT),
    )(*args)
    if write_attn:
        return outs[0], outs[1]
    return outs[0], None


# ----------------------------------------------------------------------------
# Fused head-mean + row-wise L2 normalization (final logits)
# ----------------------------------------------------------------------------
def _mean_l2norm_kernel(x_ref, o_ref):
    x = jnp.mean(x_ref[...], axis=0)                       # (TM, C) mean over heads
    nrm = jnp.sqrt(jnp.sum(x * x, axis=-1, keepdims=True))
    o_ref[...] = x / jnp.maximum(nrm, jnp.float32(1e-12))


def mean_l2norm_pallas(x_hnc):
    nh, n_pad, c = x_hnc.shape
    tm = _divisor_tile(n_pad)
    return pl.pallas_call(
        _mean_l2norm_kernel,
        out_shape=jax.ShapeDtypeStruct((n_pad, c), jnp.float32),
        grid=(n_pad // tm,),
        in_specs=[pl.BlockSpec((nh, tm, c), lambda i: (0, i, 0))],
        out_specs=pl.BlockSpec((tm, c), lambda i: (i, 0)),
        compiler_params=pltpu.CompilerParams(
            dimension_semantics=("parallel",),
            vmem_limit_bytes=_VMEM_LIMIT),
    )(x_hnc)


# ----------------------------------------------------------------------------
# Parameters (deterministic init) and forward glue
# ----------------------------------------------------------------------------
def xavier_normal(key, shape, gain=1.414):
    fan_in, fan_out = shape
    std = gain * math.sqrt(2.0 / (fan_in + fan_out))
    return std * jax.random.normal(key, shape, dtype=jnp.float32)


def init_params(key, in_dims, num_hidden, num_classes, num_layers, heads,
                edge_dim, num_etypes):
    params = {}
    kit = iter(jax.random.split(key, 128))
    params["fc"] = [{"w": xavier_normal(next(kit), (d, num_hidden)),
                     "b": jnp.zeros((num_hidden,), jnp.float32)}
                    for d in in_dims]
    layer_in = [num_hidden] + [num_hidden * heads[l - 1]
                               for l in range(1, num_layers + 1)]
    layer_out = [num_hidden] * num_layers + [num_classes]
    params["gat"] = []
    for l in range(num_layers + 1):
        fin, fout, nh = layer_in[l], layer_out[l], heads[l]
        w_fc = xavier_normal(next(kit), (fin, nh * fout))
        lp = {
            "w_fc": w_fc.reshape(fin, nh, fout).transpose(1, 0, 2),     # (H, fin, fout)
            "attn_l": 0.1 * jax.random.normal(next(kit), (nh, fout), jnp.float32),
            "attn_r": 0.1 * jax.random.normal(next(kit), (nh, fout), jnp.float32),
            "attn_e": 0.1 * jax.random.normal(next(kit), (nh, edge_dim), jnp.float32),
            "edge_emb": 0.1 * jax.random.normal(next(kit), (num_etypes, edge_dim), jnp.float32),
            "w_fce": xavier_normal(next(kit), (edge_dim, nh * edge_dim)),
            "w_res": None,
        }
        if l > 0 and fin != nh * fout:   # layer 0 has residual=False in the module
            w_res = xavier_normal(next(kit), (fin, nh * fout))
            lp["w_res"] = w_res.reshape(fin, nh, fout).transpose(1, 0, 2)
        params["gat"].append(lp)
    return params


def build_ee_table(lp, nh, edge_dim, num_etypes):
    """(H, num_etypes) per-head attention contribution of each edge type."""
    emb_proj = (lp["edge_emb"] @ lp["w_fce"]).reshape(num_etypes, nh, edge_dim)
    return jnp.einsum("the,he->ht", emb_proj, lp["attn_e"])


def changed_gat_forward(params, features_list, adj_etype, *, num_hidden,
                        num_classes, num_layers, heads, edge_dim, num_etypes,
                        negative_slope=0.2, alpha=0.05, residual=True):
    # per-node-type input projections (fc_list) then concat over nodes (dim 0)
    h = jnp.concatenate(
        [linear_pallas(x, p["w"], p["b"])
         for x, p in zip(features_list, params["fc"])], axis=0)
    n = h.shape[0]
    n_pad = _round_up(n, _LANE)

    # pad node axis to a lane multiple; padded nodes have no edges (etype = -1)
    h = jnp.pad(h, ((0, n_pad - n), (0, 0)))
    et = jnp.pad(adj_etype.astype(jnp.int32),
                 ((0, n_pad - n), (0, n_pad - n)), constant_values=-1)

    res_attn = None
    encoded = None
    for l in range(num_layers + 1):
        lp = params["gat"][l]
        nh = heads[l]
        fout = num_hidden if l < num_layers else num_classes
        is_last = (l == num_layers)
        use_res_attn = (res_attn is not None) and (not is_last)
        use_residual = residual and (l > 0)

        # W h -> (H, n_pad, fout), head-major directly from the kernel
        feat = headed_linear_pallas(h, lp["w_fc"])

        # attention projections hoisted out of the kernel (tiny; keeps the MXU
        # slot inside the GAT kernel for the a @ Wh contraction)
        el = jnp.einsum("hnd,hd->hn", feat, lp["attn_l"])[:, None, :]   # (H, 1, Np)
        er = jnp.einsum("hnd,hd->hn", feat, lp["attn_r"])[:, :, None]   # (H, Np, 1)
        ee_tab = build_ee_table(lp, nh, edge_dim, num_etypes)           # (H, T)

        resf = None
        if use_residual:
            if lp["w_res"] is None:     # identity residual (fin == H * fout)
                resf = h.reshape(n_pad, nh, fout).transpose(1, 0, 2)
            else:
                resf = headed_linear_pallas(h, lp["w_res"])

        out, attn = gat_conv_pallas(
            feat.astype(jnp.bfloat16), el, er, et, ee_tab, res_attn, resf,
            num_etypes=num_etypes, negative_slope=negative_slope, alpha=alpha,
            use_res_attn=use_res_attn, use_residual=use_residual,
            use_activation=(not is_last), write_attn=(not is_last))

        if is_last:
            logits = mean_l2norm_pallas(out)[:n]          # mean over heads + / max(||.||, 1e-12)
            return logits, encoded[:n]

        h = out.transpose(1, 0, 2).reshape(n_pad, nh * fout)   # h.flatten(1)
        encoded = h                                            # encoded_embeddings
        res_attn = attn                                        # bf16, (H, Np, Np)


# ----------------------------------------------------------------------------
# Example run
# ----------------------------------------------------------------------------
if __name__ == "__main__":
    key = jax.random.PRNGKey(0)
    k_feat, k_graph, k_et, k_param = jax.random.split(key, 4)

    num_ntype = 2
    in_dims = [12, 8]
    nodes_per_type = [10, 6]
    N = sum(nodes_per_type)
    num_hidden = 32
    num_classes = 8
    num_layers = 2
    heads = [2, 2, 1]
    edge_dim = 16
    num_etypes = 4

    fkeys = jax.random.split(k_feat, num_ntype)
    features_list = [jax.random.normal(fk, (n, d), jnp.float32)
                     for fk, n, d in zip(fkeys, nodes_per_type, in_dims)]

    # deterministic dense graph with self-loops (self-loop etype = num_etypes-1)
    adj = (jax.random.uniform(k_graph, (N, N)) < 0.3).astype(jnp.int32)
    adj = jnp.maximum(adj, jnp.eye(N, dtype=jnp.int32))
    etype = jax.random.randint(k_et, (N, N), 0, num_etypes - 1)
    etype = jnp.where(jnp.eye(N, dtype=bool), num_etypes - 1, etype)
    adj_etype = jnp.where(adj > 0, etype, -1).astype(jnp.int32)

    params = init_params(k_param, in_dims, num_hidden, num_classes,
                         num_layers, heads, edge_dim, num_etypes)

    logits, encoded = changed_gat_forward(
        params, features_list, adj_etype,
        num_hidden=num_hidden, num_classes=num_classes,
        num_layers=num_layers, heads=heads, edge_dim=edge_dim,
        num_etypes=num_etypes, negative_slope=0.2, alpha=0.05, residual=True)

    jax.block_until_ready((logits, encoded))
    assert logits.shape == (N, num_classes)
    assert encoded.shape == (N, num_hidden * heads[num_layers - 1])
    assert bool(jnp.all(jnp.isfinite(logits)))
    assert bool(jnp.all(jnp.isfinite(encoded)))
    print("KERNEL_OK")
</pallas_src>

<mosaic_0001>
module attributes {stable_mosaic.version = 11 : i64} {
  func.func @_linear_bias_kernel(%arg0: i32, %arg1: memref<16x12xf32, #tpu.memory_space<vmem>>, %arg2: memref<12x32xf32, #tpu.memory_space<vmem>>, %arg3: memref<1x32xf32, #tpu.memory_space<vmem>>, %arg4: memref<16x32xf32, #tpu.memory_space<vmem>>) attributes {dimension_semantics = [#tpu.dimension_semantics<parallel>], iteration_bounds = array<i64: 1>, scalar_prefetch = 0 : i64, scratch_operands = 0 : i64, tpu.core_type = #tpu.core_type<tc>, window_params = [{transform_indices = @transform_0, window_bounds = array<i64: 16, 12>}, {pipeline_mode = #tpu.pipeline_mode<synchronous>, transform_indices = @transform_1, window_bounds = array<i64: 12, 32>}, {pipeline_mode = #tpu.pipeline_mode<synchronous>, transform_indices = @transform_2, window_bounds = array<i64: 1, 32>}, {transform_indices = @transform_3, window_bounds = array<i64: 16, 32>}]} {
    %c0 = arith.constant 0 : index
    %c0_0 = arith.constant 0 : index
    %0 = vector.load %arg1[%c0, %c0_0] : memref<16x12xf32, #tpu.memory_space<vmem>>, vector<16x12xf32>
    %c0_1 = arith.constant 0 : index
    %c0_2 = arith.constant 0 : index
    %1 = vector.load %arg2[%c0_1, %c0_2] : memref<12x32xf32, #tpu.memory_space<vmem>>, vector<12x32xf32>
    %cst = arith.constant dense<0.000000e+00> : vector<16x32xf32>
    %2 = tpu.matmul %0, %1, %cst {dimension_numbers = #tpu.dot_dimension_numbers<[1], [0], [0], [1], [0, 0, 1, 1], [], []>} : vector<16x12xf32>, vector<12x32xf32>, vector<16x32xf32> -> vector<16x32xf32>
    %c0_3 = arith.constant 0 : index
    %c0_4 = arith.constant 0 : index
    %3 = vector.load %arg3[%c0_3, %c0_4] : memref<1x32xf32, #tpu.memory_space<vmem>>, vector<1x32xf32>
    %4 = vector.broadcast %3 : vector<1x32xf32> to vector<16x32xf32>
    %5 = arith.addf %2, %4 : vector<16x32xf32>
    %c0_5 = arith.constant 0 : index
    %c0_6 = arith.constant 0 : index
    %6 = vector.load %arg4[%c0_5, %c0_6] : memref<16x32xf32, #tpu.memory_space<vmem>>, vector<16x32xf32>
    tpu.vector_store %arg4[%c0_5, %c0_6], %5 {strides = array<i32>} : memref<16x32xf32, #tpu.memory_space<vmem>>, vector<16x32xf32>,
    return
  }
  func.func @transform_0(%arg0: i32) -> (i32, i32) {
    %c0_i32 = arith.constant 0 : i32
    %c0_i32_0 = arith.constant 0 : i32
    return %arg0, %c0_i32 : i32, i32
  }
  func.func @transform_1(%arg0: i32) -> (i32, i32) {
    %c0_i32 = arith.constant 0 : i32
    %c0_i32_0 = arith.constant 0 : i32
    %c0_i32_1 = arith.constant 0 : i32
    return %c0_i32, %c0_i32_0 : i32, i32
  }
  func.func @transform_2(%arg0: i32) -> (i32, i32) {
    %c0_i32 = arith.constant 0 : i32
    %c0_i32_0 = arith.constant 0 : i32
    %c0_i32_1 = arith.constant 0 : i32
    return %c0_i32, %c0_i32_0 : i32, i32
  }
  func.func @transform_3(%arg0: i32) -> (i32, i32) {
    %c0_i32 = arith.constant 0 : i32
    %c0_i32_0 = arith.constant 0 : i32
    return %arg0, %c0_i32 : i32, i32
  }
}

</mosaic_0001>

<llo_original>
// kernel: tpu_custom_call.1
$region0: #{tpu_custom_call.1}
  #allocation0 [shape = 'u32[]', space=smem, size = 0x4, offset = 0x4, fixed_abs, tag = 'smem constant byte address 0x4 - core index']
  #allocation1 [shape = 'u32[72,128]{1,0:T(1,128)}', space=vmem, size = 0x9000, scoped, tag = 'internal scratch']
  %s0 = inlined_call_operand.hbm [shape: f32[16,12], index: 0, kind: input, shape index: {}]
  %s1 = inlined_call_operand.hbm [shape: f32[12,32], index: 1, kind: input, shape index: {}]
  %s2 = inlined_call_operand.vmem [shape: f32[1,32], index: 2, kind: input, shape index: {}]
  %s3 = inlined_call_operand.hbm [shape: f32[16,32], index: 3, kind: output, shape index: {}]
  %s4 = sld [smem:[#allocation0]]
  $region30: #{tpu_custom_call.1} parent=0
    _
  %s6 = ssub.s32 1, %s4
  %s7 = scalar_select 0, %s6, %s4
  $region1: #{tpu_custom_call.1} parent=0
    #allocation2 [shape = 'u8[8192]{0}', space=vmem, size = 0x2000, scoped, tag = 'input window, operand 0, single buffered']
    #allocation3 [shape = 's32[1]{0}', space=sflag, size = 0x4, scoped, tag = 'scoped memory for tpu_custom_call.1']
    #allocation4 [shape = 's32[1]{0}', space=sflag, size = 0x4, scoped, tag = 'scoped memory for tpu_custom_call.1']
    #allocation5 [shape = 'u8[8192]{0}', space=vmem, size = 0x2000, scoped, tag = 'input window, operand 1, single buffered']
    #allocation6 [shape = 's32[1]{0}', space=sflag, size = 0x4, scoped, tag = 'scoped memory for tpu_custom_call.1']
    #allocation7 [shape = 'u8[8192]{0}', space=vmem, size = 0x2000, scoped, tag = 'output window, operand 0, single buffered']
    %8 = vsyncpa [#allocation3], 0
    %9 = vsyncpa [#allocation6], 0
    %10 = vsyncpa [#allocation4], 0
    // Predicated region
    $region2: #{tpu_custom_call.1} parent=1 // pred_check
      _
    $region3: #{tpu_custom_call.1} parent=1 // pred_check_branch
      %12 = sbr.rel (0) target = $region5
    $region4: #{tpu_custom_call.1} parent=1 // pred_region
      %14 = vsyncadd [#allocation3], 0
      %s15 = sshll.u32 %s0, 4
      %s16 = int_to_ptr.hbm [resolvable:$true] %s15
      %s17 = sshll.u32 [#allocation2], 4
      %s18 = int_to_ptr.vmem [resolvable:$true] %s17
      %23 = dma.hbm_to_vmem [thread:$0]  %s16, 256, %s18, [#allocation3], 128, 128, 8
    $region5: #{tpu_custom_call.1} parent=1 // pred_fallthru
      _
    // Predicated region
    $region6: #{tpu_custom_call.1} parent=1 // pred_check
      _
    $region7: #{tpu_custom_call.1} parent=1 // pred_check_branch
      %25 = sbr.rel (0) target = $region9
    $region8: #{tpu_custom_call.1} parent=1 // pred_region
      %27 = vsyncadd [#allocation6], 0
      %s28 = sshll.u32 %s1, 4
      %s29 = int_to_ptr.hbm [resolvable:$true] %s28
      %s30 = sshll.u32 [#allocation5], 4
      %s31 = int_to_ptr.vmem [resolvable:$true] %s30
      %36 = dma.hbm_to_vmem [thread:$0]  %s29, 256, %s31, [#allocation6], 128, 128, 8
    $region9: #{tpu_custom_call.1} parent=1 // pred_fallthru
      _
    // Predicated region
    $region10: #{tpu_custom_call.1} parent=1 // pred_check
      _
    $region11: #{tpu_custom_call.1} parent=1 // pred_check_branch
      %38 = sbr.rel (0) target = $region13
    $region12: #{tpu_custom_call.1} parent=1 // pred_region
      _
    $region13: #{tpu_custom_call.1} parent=1 // pred_fallthru
      _
    // Predicated region
    $region14: #{tpu_custom_call.1} parent=1 // pred_check
      _
    $region15: #{tpu_custom_call.1} parent=1 // pred_check_branch
      %40 = sbr.rel (0) target = $region17
    $region16: #{tpu_custom_call.1} parent=1 // pred_region
      %42 = dma.done [#allocation3], 256
    $region17: #{tpu_custom_call.1} parent=1 // pred_fallthru
      _
    // Predicated region
    $region18: #{tpu_custom_call.1} parent=1 // pred_check
      _
    $region19: #{tpu_custom_call.1} parent=1 // pred_check_branch
      %44 = sbr.rel (0) target = $region21
    $region20: #{tpu_custom_call.1} parent=1 // pred_region
      %46 = dma.done [#allocation6], 256
    $region21: #{tpu_custom_call.1} parent=1 // pred_fallthru
      _
    %v47 = vld [vmem:[#allocation2] sm:$0xff]
    %v48 = vld [vmem:[#allocation2 + $0x8] sm:$0xff]
    %v49 = vld [vmem:[#allocation5] sm:$0xff]
    %v50 = vld [vmem:[#allocation5 + $0x8] sm:$0xf]
    %v51 = vld [vmem:[%s2] sm:$0x1]
    %v53 = vperm.slane %v51, 0
    %vm55 = vcmask 97280
    %v57 = vsel %vm55, %v47, 0
    %v60 = vsel %vm55, %v48, 0
    %vm62 = vcmask 1043456
    %v64 = vsel %vm62, %v50, 0
    %66 = vmatpush.msra.mxu0 0.0
    %67 = vmatpush.msra.mxu0 0.0
    %68 = vmatpush.msra.mxu0 0.0
    %69 = vmatpush.msra.mxu0 0.0
    %70 = vmatpush.msra.mxu0 0.0
    %71 = vmatpush.msra.mxu0 0.0
    %72 = vmatpush.msra.mxu0 0.0
    %73 = vmatpush.msra.mxu0 0.0
    %74 = vmatpush.msra.mxu0 0.0
    %75 = vmatpush.msra.mxu0 0.0
    %76 = vmatpush.msra.mxu0 0.0
    %77 = vmatpush.msra.mxu0 0.0
    %78 = vmatpush.msra.mxu0 0.0
    %79 = vmatpush.msra.mxu0 0.0
    %80 = vmatpush.msra.mxu0 %v64
    %81 = vmatpush.msra.mxu0 %v49
    %82 = vmatmul.f32.gmra.mxu0 %v57
    %v83 = vpop.f32.mrf.mxu0
    %v84 = vadd.f32 %v53, %v83
    %85 = vmatmul.f32.gmra.mxu0 %v60
    %v86 = vpop.f32.mrf.mxu0
    %v87 = vadd.f32 %v53, %v86
    %88 = vdwg.mxu0
    %vm89 = vcmask 261120
    %90 = vst.msk [vmem:[#allocation7] sm:$0xff] %vm89, %v84
    %91 = vst.msk [vmem:[#allocation7 + $0x8] sm:$0xff] %vm89, %v87
    // Predicated region
    $region22: #{tpu_custom_call.1} parent=1 // pred_check
      _
    $region23: #{tpu_custom_call.1} parent=1 // pred_check_branch
      %93 = sbr.rel (0) target = $region25
    $region24: #{tpu_custom_call.1} parent=1 // pred_region
      %95 = vsyncadd [#allocation4], 0
      %s96 = sshll.u32 [#allocation7], 4
      %s97 = int_to_ptr.vmem [resolvable:$true] %s96
      %s98 = sshll.u32 %s3, 4
      %s99 = int_to_ptr.hbm [resolvable:$true] %s98
      %104 = dma.vmem_to_hbm [thread:$0]  %s97, 256, %s99, [#allocation4], 128, 128, 8
    $region25: #{tpu_custom_call.1} parent=1 // pred_fallthru
      _
    // Predicated region
    $region26: #{tpu_custom_call.1} parent=1 // pred_check
      _
    $region27: #{tpu_custom_call.1} parent=1 // pred_check_branch
      %106 = sbr.rel (0) target = $region29
    $region28: #{tpu_custom_call.1} parent=1 // pred_region
      %108 = dma.done [#allocation4], 256
    $region29: #{tpu_custom_call.1} parent=1 // pred_fallthru
      _
    %109 = vsyncpa [#allocation3], 1
    %110 = vsyncpa [#allocation6], 1
    %111 = vsyncpa [#allocation4], 1

</llo_original>
